<compile_context>
chip_gen: v6e
topology: v6e:2x2x1
jax: 0.10.0
libtpu: 0.0.40
codegen_flags: <defaults>
</compile_context>

<pallas_src>
import functools

import jax
import jax.numpy as jnp
from jax import lax
from jax.experimental import pallas as pl
from jax.experimental.pallas import tpu as pltpu


def _cdiv(a, b):
    return (a + b - 1) // b


def _round_up(x, m):
    return _cdiv(x, m) * m


def _memory_kernel(x_ref, w_ref, dist_ref, cos_ref, acc_ref, x2_ref, w2_ref,
                   *, cache_x2):
    """Grid point (i, j, k): x tile (tm, tk), w tile (tn, tk), out tile (tm, tn).

    cache_x2 (static): if True, ||x||^2 is accumulated only on the j == 0 sweep
    and reused for j > 0 (requires the j axis to be sequential per core).
    """
    j = pl.program_id(1)
    k = pl.program_id(2)

    @pl.when(k == 0)
    def _init():
        acc_ref[...] = jnp.zeros_like(acc_ref)
        w2_ref[...] = jnp.zeros_like(w2_ref)

    x = x_ref[...]                       # (tm, tk), native dtype
    w = w_ref[...]                       # (tn, tk), native dtype

    # MXU: x . w^T partial product, f32 accumulation in VMEM scratch.
    acc_ref[...] += lax.dot_general(
        x, w,
        dimension_numbers=(((1,), (1,)), ((), ())),
        preferred_element_type=jnp.float32,
    )

    # Centroid row squared-norm partials ride the same K loop (no extra HBM pass).
    wf = w.astype(jnp.float32)
    w2_ref[...] += jnp.sum(wf * wf, axis=-1, keepdims=True)      # (tn, 1)

    # Input row squared-norm partials.
    if cache_x2:
        @pl.when((j == 0) & (k == 0))
        def _zero_x2():
            x2_ref[...] = jnp.zeros_like(x2_ref)

        @pl.when(j == 0)
        def _acc_x2():
            xf = x.astype(jnp.float32)
            x2_ref[...] += jnp.sum(xf * xf, axis=-1, keepdims=True)
    else:
        @pl.when(k == 0)
        def _zero_x2():
            x2_ref[...] = jnp.zeros_like(x2_ref)

        xf = x.astype(jnp.float32)
        x2_ref[...] += jnp.sum(xf * xf, axis=-1, keepdims=True)   # (tm, 1)

    @pl.when(k == pl.num_programs(2) - 1)
    def _finalize():
        xw = acc_ref[...]                # (tm, tn) f32
        x2 = x2_ref[...]                 # (tm, 1)
        w2t = w2_ref[...].T              # (1, tn) -- one XLU transpose per output tile

        # Euclidean distance via ||x||^2 + ||w||^2 - 2 x.w, clamped at 0.
        sq = x2 + w2t - 2.0 * xw
        dist_ref[...] = jnp.sqrt(jnp.maximum(sq, 0.0)).astype(dist_ref.dtype)

        # Cosine: rsqrt (EUP) + broadcast multiplies.  min(rsqrt(n2), 1e12) is
        # exactly 1/max(n, 1e-12), matching F.normalize (rsqrt(0) = inf -> 1e12).
        inv_xn = jnp.minimum(lax.rsqrt(x2), 1e12)
        inv_wn = jnp.minimum(lax.rsqrt(w2t), 1e12)
        cos_ref[...] = (xw * inv_xn * inv_wn).astype(cos_ref.dtype)


def _choose_tiles(B, C, D):
    """Pick (tm, tn, tk) and padded extents (Bp, Cp, Dp).

    Goals: big tiles (big DMAs, few grid steps), no re-pad of the centroid
    table along D (and, when possible, along C), balanced last tiles, and at
    least two output tiles when possible so v7x megacore has work.
    """
    TM_CAP, TN_CAP, TK_CAP = 512, 512, 1024

    # ---- reduction (D) axis: never pad the table along D unless forced ----
    if D % 128 == 0:
        tk = next(c for c in (1024, 512, 256, 128) if D % c == 0 and c <= TK_CAP)
        Dp = D
    elif D <= 2048:
        tk = D          # full-axis block: legal for any size, no padding
        Dp = D
    else:
        # Rare corner (large, non-128-multiple D): padding is unavoidable.
        tk = TK_CAP
        Dp = _round_up(D, tk)

    # ---- batch (B) axis: balanced tiles, 8-granular ----
    ni = max(1, _cdiv(B, TM_CAP))
    tm = _round_up(_cdiv(B, ni), 8)

    # ---- centroid (C) axis: 128-granular; avoid padding the table if C%128==0 ----
    if C % 128 == 0:
        units = C // 128
        d = 1
        for cand in range(min(units, TN_CAP // 128), 0, -1):
            if units % cand == 0:
                d = cand
                break
        tn = d * 128
        Cp = C
    else:
        nj = max(1, _cdiv(C, TN_CAP))
        tn = _round_up(_cdiv(C, nj), 128)
        Cp = tn * nj

    # ---- v7x megacore: avoid a single output tile when it can be split ----
    if ni * (Cp // tn) == 1:
        if C % 128 == 0 and C // 128 >= 2:
            units = C // 128
            for cand in range(units // 2, 0, -1):
                if units % cand == 0:
                    tn = cand * 128
                    break
            Cp = C
        elif C % 128 != 0 and _round_up(C, 128) >= 256:
            tn = _round_up(_cdiv(C, 2), 128)
            Cp = 2 * tn
        elif B >= 16:
            ni = 2
            tm = _round_up(_cdiv(B, 2), 8)

    Bp = tm * ni
    return tm, tn, tk, Bp, Cp, Dp


def student_memory_forward(inp, centroid_weight, *, max_seq_length, hidden_size):
    """Replicates Student_Memory.forward.

    inp:             (..., max_seq_length, hidden_size) (any shape whose trailing
                     elements reshape to D = max_seq_length*hidden_size)
    centroid_weight: (num_centroid, D) -- the Embedding weight table
    returns (centroid, dist, cos)
    """
    D = max_seq_length * hidden_size
    x = inp.reshape(-1, D)               # keep native dtype; no f32 upcast here
    w = centroid_weight
    B, C = x.shape[0], w.shape[0]

    tm, tn, tk, Bp, Cp, Dp = _choose_tiles(B, C, D)
    num_i, num_j, num_k = Bp // tm, Cp // tn, Dp // tk

    # ||x||^2 is cached across the j loop only when the j axis runs sequentially
    # inside each core (i.e. i provides the megacore parallelism).  When there is
    # only one batch tile, keep j "parallel" so both v7x TCs get work and simply
    # recompute the (cheap, tm<=512) x2 partial each step.
    cache_x2 = num_i >= 2
    if cache_x2:
        dims = ("parallel", "arbitrary", "arbitrary")
    else:
        dims = ("parallel", "parallel", "arbitrary")

    # Zero-pad only where required (B to tm-grain, C to tn-grain, D only in the
    # rare forced case above).  Zero padding does not perturb dot products/norms.
    xp = jnp.pad(x, ((0, Bp - B), (0, Dp - D))) if (Bp, Dp) != (B, D) else x
    wp = jnp.pad(w, ((0, Cp - C), (0, Dp - D))) if (Cp, Dp) != (C, D) else w

    grid = (num_i, num_j, num_k)
    kernel = functools.partial(_memory_kernel, cache_x2=cache_x2)

    dist_p, cos_p = pl.pallas_call(
        kernel,
        out_shape=(
            jax.ShapeDtypeStruct((Bp, Cp), jnp.float32),
            jax.ShapeDtypeStruct((Bp, Cp), jnp.float32),
        ),
        grid_spec=pltpu.PrefetchScalarGridSpec(
            num_scalar_prefetch=0,
            grid=grid,
            in_specs=[
                pl.BlockSpec((tm, tk), lambda i, j, k: (i, k)),   # x tiles
                pl.BlockSpec((tn, tk), lambda i, j, k: (j, k)),   # centroid tiles
            ],
            out_specs=[
                pl.BlockSpec((tm, tn), lambda i, j, k: (i, j)),   # dist
                pl.BlockSpec((tm, tn), lambda i, j, k: (i, j)),   # cos
            ],
            scratch_shapes=[
                pltpu.VMEM((tm, tn), jnp.float32),                # x.w^T accumulator
                pltpu.VMEM((tm, 1), jnp.float32),                 # ||x||^2 accumulator
                pltpu.VMEM((tn, 1), jnp.float32),                 # ||w||^2 accumulator
            ],
        ),
        compiler_params=pltpu.CompilerParams(
            dimension_semantics=dims,
            # Above the v5e/v6e/v7x scoped defaults so the 512/512/1024 tiles get
            # full double-buffering; well under the v7x 64 MiB physical ceiling.
            vmem_limit_bytes=48 * 1024 * 1024,
        ),
    )(xp, wp)

    dist = dist_p[:B, :C]
    cos = cos_p[:B, :C]

    # The module also returns the (arange-gathered) centroid table itself,
    # which is just the embedding weight.
    return w, dist, cos


if __name__ == "__main__":
    # Small config consistent with the module.
    num_centroid = 16
    hidden_size = 32
    max_seq_length = 8
    batch = 2
    D = max_seq_length * hidden_size

    key = jax.random.PRNGKey(0)
    k_x, k_w = jax.random.split(key)

    # input: (batch, max_seq_length, hidden_size) -> viewed to (batch, D)
    x = jax.random.normal(k_x, (batch, max_seq_length, hidden_size), jnp.float32)
    # Embedding weight init ~ N(0, 1), deterministic from the PRNG key.
    centroid_weight = jax.random.normal(k_w, (num_centroid, D), jnp.float32)

    centroid, dist, cos = student_memory_forward(
        x, centroid_weight,
        max_seq_length=max_seq_length, hidden_size=hidden_size,
    )
    jax.block_until_ready((centroid, dist, cos))

    # Lightweight sanity check against a pure-JAX reference.
    xf = x.reshape(-1, D)
    dist_ref = jnp.sqrt(
        jnp.maximum(
            jnp.sum((xf[:, None, :] - centroid_weight[None, :, :]) ** 2, axis=-1),
            0.0,
        )
    )
    xn = xf / jnp.maximum(jnp.linalg.norm(xf, axis=-1, keepdims=True), 1e-12)
    wn = centroid_weight / jnp.maximum(
        jnp.linalg.norm(centroid_weight, axis=-1, keepdims=True), 1e-12
    )
    cos_ref = xn @ wn.T

    assert dist.shape == (batch, num_centroid)
    assert cos.shape == (batch, num_centroid)
    assert centroid.shape == (num_centroid, D)
    assert jnp.allclose(dist, dist_ref, atol=1e-3, rtol=1e-4)
    assert jnp.allclose(cos, cos_ref, atol=1e-4, rtol=1e-4)

    print("KERNEL_OK")
</pallas_src>

<mosaic_0001>
module attributes {stable_mosaic.version = 11 : i64} {
  func.func @_memory_kernel(%arg0: i32, %arg1: i32, %arg2: i32, %arg3: memref<8x256xf32, #tpu.memory_space<vmem>>, %arg4: memref<128x256xf32, #tpu.memory_space<vmem>>, %arg5: memref<8x128xf32, #tpu.memory_space<vmem>>, %arg6: memref<8x128xf32, #tpu.memory_space<vmem>>, %arg7: memref<8x128xf32, #tpu.memory_space<vmem>>, %arg8: memref<8x1xf32, #tpu.memory_space<vmem>>, %arg9: memref<128x1xf32, #tpu.memory_space<vmem>>) attributes {dimension_semantics = [#tpu.dimension_semantics<parallel>, #tpu.dimension_semantics<parallel>, #tpu.dimension_semantics<arbitrary>], iteration_bounds = array<i64: 1, 1, 1>, scalar_prefetch = 0 : i64, scratch_operands = 3 : i64, tpu.core_type = #tpu.core_type<tc>, window_params = [{transform_indices = @transform_0, window_bounds = array<i64: 8, 256>}, {transform_indices = @transform_1, window_bounds = array<i64: 128, 256>}, {transform_indices = @transform_2, window_bounds = array<i64: 8, 128>}, {transform_indices = @transform_3, window_bounds = array<i64: 8, 128>}]} {
    %c0_i32 = arith.constant 0 : i32
    %0 = arith.cmpi eq, %arg2, %c0_i32 : i32
    %1 = arith.extui %0 : i1 to i32
    %c0_i32_0 = arith.constant 0 : i32
    %2 = arith.cmpi ne, %1, %c0_i32_0 : i32
    scf.if %2 {
      %cst_22 = arith.constant 0.000000e+00 : f32
      %27 = vector.broadcast %cst_22 : f32 to vector<8x128xf32>
      %c0_23 = arith.constant 0 : index
      %c0_24 = arith.constant 0 : index
      %28 = vector.load %arg7[%c0_23, %c0_24] : memref<8x128xf32, #tpu.memory_space<vmem>>, vector<8x128xf32>
      tpu.vector_store %arg7[%c0_23, %c0_24], %27 {strides = array<i32>} : memref<8x128xf32, #tpu.memory_space<vmem>>, vector<8x128xf32>,
      %cst_25 = arith.constant 0.000000e+00 : f32
      %29 = vector.broadcast %cst_25 : f32 to vector<128x1xf32>
      %c0_26 = arith.constant 0 : index
      %c0_27 = arith.constant 0 : index
      %30 = vector.load %arg9[%c0_26, %c0_27] : memref<128x1xf32, #tpu.memory_space<vmem>>, vector<128x1xf32>
      tpu.vector_store %arg9[%c0_26, %c0_27], %29 {strides = array<i32>} : memref<128x1xf32, #tpu.memory_space<vmem>>, vector<128x1xf32>,
    } else {
    }
    %c0 = arith.constant 0 : index
    %c0_1 = arith.constant 0 : index
    %3 = vector.load %arg3[%c0, %c0_1] : memref<8x256xf32, #tpu.memory_space<vmem>>, vector<8x256xf32>
    %c0_2 = arith.constant 0 : index
    %c0_3 = arith.constant 0 : index
    %4 = vector.load %arg4[%c0_2, %c0_3] : memref<128x256xf32, #tpu.memory_space<vmem>>, vector<128x256xf32>
    %c0_4 = arith.constant 0 : index
    %c0_5 = arith.constant 0 : index
    %5 = vector.load %arg7[%c0_4, %c0_5] : memref<8x128xf32, #tpu.memory_space<vmem>>, vector<8x128xf32>
    %cst = arith.constant dense<0.000000e+00> : vector<8x128xf32>
    %6 = tpu.matmul %3, %4, %cst {dimension_numbers = #tpu.dot_dimension_numbers<[1], [1], [0], [0], [0, 0, 1, 0], [], []>} : vector<8x256xf32>, vector<128x256xf32>, vector<8x128xf32> -> vector<8x128xf32>
    %7 = arith.addf %5, %6 : vector<8x128xf32>
    %c0_6 = arith.constant 0 : index
    %c0_7 = arith.constant 0 : index
    %8 = vector.load %arg7[%c0_6, %c0_7] : memref<8x128xf32, #tpu.memory_space<vmem>>, vector<8x128xf32>
    tpu.vector_store %arg7[%c0_6, %c0_7], %7 {strides = array<i32>} : memref<8x128xf32, #tpu.memory_space<vmem>>, vector<8x128xf32>,
    %c0_8 = arith.constant 0 : index
    %c0_9 = arith.constant 0 : index
    %9 = vector.load %arg9[%c0_8, %c0_9] : memref<128x1xf32, #tpu.memory_space<vmem>>, vector<128x1xf32>
    %10 = arith.mulf %4, %4 : vector<128x256xf32>
    %cst_10 = arith.constant dense<0.000000e+00> : vector<128xf32>
    %11 = vector.multi_reduction <add>, %10, %cst_10 [1] : vector<128x256xf32> to vector<128xf32>
    %12 = vector.shape_cast %11 : vector<128xf32> to vector<128x1xf32>
    %13 = arith.addf %9, %12 : vector<128x1xf32>
    %c0_11 = arith.constant 0 : index
    %c0_12 = arith.constant 0 : index
    %14 = vector.load %arg9[%c0_11, %c0_12] : memref<128x1xf32, #tpu.memory_space<vmem>>, vector<128x1xf32>
    tpu.vector_store %arg9[%c0_11, %c0_12], %13 {strides = array<i32>} : memref<128x1xf32, #tpu.memory_space<vmem>>, vector<128x1xf32>,
    %c0_i32_13 = arith.constant 0 : i32
    %15 = arith.cmpi eq, %arg2, %c0_i32_13 : i32
    %16 = arith.extui %15 : i1 to i32
    %c0_i32_14 = arith.constant 0 : i32
    %17 = arith.cmpi ne, %16, %c0_i32_14 : i32
    scf.if %17 {
      %cst_22 = arith.constant 0.000000e+00 : f32
      %27 = vector.broadcast %cst_22 : f32 to vector<8x1xf32>
      %c0_23 = arith.constant 0 : index
      %c0_24 = arith.constant 0 : index
      %28 = vector.load %arg8[%c0_23, %c0_24] : memref<8x1xf32, #tpu.memory_space<vmem>>, vector<8x1xf32>
      tpu.vector_store %arg8[%c0_23, %c0_24], %27 {strides = array<i32>} : memref<8x1xf32, #tpu.memory_space<vmem>>, vector<8x1xf32>,
    } else {
    }
    %c0_15 = arith.constant 0 : index
    %c0_16 = arith.constant 0 : index
    %18 = vector.load %arg8[%c0_15, %c0_16] : memref<8x1xf32, #tpu.memory_space<vmem>>, vector<8x1xf32>
    %19 = arith.mulf %3, %3 : vector<8x256xf32>
    %cst_17 = arith.constant dense<0.000000e+00> : vector<8xf32>
    %20 = vector.multi_reduction <add>, %19, %cst_17 [1] : vector<8x256xf32> to vector<8xf32>
    %21 = vector.shape_cast %20 : vector<8xf32> to vector<8x1xf32>
    %22 = arith.addf %18, %21 : vector<8x1xf32>
    %c0_18 = arith.constant 0 : index
    %c0_19 = arith.constant 0 : index
    %23 = vector.load %arg8[%c0_18, %c0_19] : memref<8x1xf32, #tpu.memory_space<vmem>>, vector<8x1xf32>
    tpu.vector_store %arg8[%c0_18, %c0_19], %22 {strides = array<i32>} : memref<8x1xf32, #tpu.memory_space<vmem>>, vector<8x1xf32>,
    %c0_i32_20 = arith.constant 0 : i32
    %24 = arith.cmpi eq, %arg2, %c0_i32_20 : i32
    %25 = arith.extui %24 : i1 to i32
    %c0_i32_21 = arith.constant 0 : i32
    %26 = arith.cmpi ne, %25, %c0_i32_21 : i32
    scf.if %26 {
      %c0_22 = arith.constant 0 : index
      %c0_23 = arith.constant 0 : index
      %27 = vector.load %arg7[%c0_22, %c0_23] : memref<8x128xf32, #tpu.memory_space<vmem>>, vector<8x128xf32>
      %c0_24 = arith.constant 0 : index
      %c0_25 = arith.constant 0 : index
      %28 = vector.load %arg8[%c0_24, %c0_25] : memref<8x1xf32, #tpu.memory_space<vmem>>, vector<8x1xf32>
      %c0_26 = arith.constant 0 : index
      %c0_27 = arith.constant 0 : index
      %29 = vector.load %arg9[%c0_26, %c0_27] : memref<128x1xf32, #tpu.memory_space<vmem>>, vector<128x1xf32>
      %30 = tpu.transpose %29, [1, 0] : vector<128x1xf32> -> vector<1x128xf32>
      %31 = vector.broadcast %28 : vector<8x1xf32> to vector<8x128xf32>
      %32 = vector.broadcast %30 : vector<1x128xf32> to vector<8x128xf32>
      %33 = arith.addf %31, %32 : vector<8x128xf32>
      %cst_28 = arith.constant 2.000000e+00 : f32
      %34 = vector.broadcast %cst_28 : f32 to vector<8x128xf32>
      %35 = arith.mulf %34, %27 : vector<8x128xf32>
      %36 = arith.subf %33, %35 : vector<8x128xf32>
      %cst_29 = arith.constant 0.000000e+00 : f32
      %37 = vector.broadcast %cst_29 : f32 to vector<8x128xf32>
      %38 = arith.maximumf %36, %37 : vector<8x128xf32>
      %39 = math.sqrt %38 : vector<8x128xf32>
      %c0_30 = arith.constant 0 : index
      %c0_31 = arith.constant 0 : index
      %40 = vector.load %arg5[%c0_30, %c0_31] : memref<8x128xf32, #tpu.memory_space<vmem>>, vector<8x128xf32>
      tpu.vector_store %arg5[%c0_30, %c0_31], %39 {strides = array<i32>} : memref<8x128xf32, #tpu.memory_space<vmem>>, vector<8x128xf32>,
      %41 = math.rsqrt %28 : vector<8x1xf32>
      %cst_32 = arith.constant 9.99999995E+11 : f32
      %42 = vector.broadcast %cst_32 : f32 to vector<8x1xf32>
      %43 = arith.minimumf %41, %42 : vector<8x1xf32>
      %44 = math.rsqrt %30 : vector<1x128xf32>
      %cst_33 = arith.constant 9.99999995E+11 : f32
      %45 = vector.broadcast %cst_33 : f32 to vector<1x128xf32>
      %46 = arith.minimumf %44, %45 : vector<1x128xf32>
      %47 = vector.broadcast %43 : vector<8x1xf32> to vector<8x128xf32>
      %48 = arith.mulf %27, %47 : vector<8x128xf32>
      %49 = vector.broadcast %46 : vector<1x128xf32> to vector<8x128xf32>
      %50 = arith.mulf %48, %49 : vector<8x128xf32>
      %c0_34 = arith.constant 0 : index
      %c0_35 = arith.constant 0 : index
      %51 = vector.load %arg6[%c0_34, %c0_35] : memref<8x128xf32, #tpu.memory_space<vmem>>, vector<8x128xf32>
      tpu.vector_store %arg6[%c0_34, %c0_35], %50 {strides = array<i32>} : memref<8x128xf32, #tpu.memory_space<vmem>>, vector<8x128xf32>,
    } else {
    }
    return
  }
  func.func @transform_0(%arg0: i32, %arg1: i32, %arg2: i32) -> (i32, i32) {
    %c0_i32 = arith.constant 0 : i32
    return %arg0, %arg2 : i32, i32
  }
  func.func @transform_1(%arg0: i32, %arg1: i32, %arg2: i32) -> (i32, i32) {
    %c0_i32 = arith.constant 0 : i32
    return %arg1, %arg2 : i32, i32
  }
  func.func @transform_2(%arg0: i32, %arg1: i32, %arg2: i32) -> (i32, i32) {
    %c0_i32 = arith.constant 0 : i32
    return %arg0, %arg1 : i32, i32
  }
  func.func @transform_3(%arg0: i32, %arg1: i32, %arg2: i32) -> (i32, i32) {
    %c0_i32 = arith.constant 0 : i32
    return %arg0, %arg1 : i32, i32
  }
}

</mosaic_0001>

<llo_original>
// kernel: tpu_custom_call.1
$region0: #{tpu_custom_call.1}
  #allocation0 [shape = 'u32[]', space=smem, size = 0x4, offset = 0x4, fixed_abs, tag = 'smem constant byte address 0x4 - core index']
  #allocation1 [shape = 'u32[144,128]{1,0:T(1,128)}', space=vmem, size = 0x12000, scoped, tag = 'internal scratch']
  #allocation2 [shape = 'f32[8,128]{1,0:T(8,128)}', space=vmem, size = 0x1000, scoped, tag = 'scratch operand']
  #allocation3 [shape = 'f32[8,1]{1,0:T(8,128)}', space=vmem, size = 0x1000, scoped, tag = 'scratch operand']
  #allocation4 [shape = 'f32[128,1]{1,0:T(8,128)}', space=vmem, size = 0x10000, scoped, tag = 'scratch operand']
  %s0 = inlined_call_operand.hbm [shape: f32[8,256], index: 0, kind: input, shape index: {}]
  %s1 = inlined_call_operand.hbm [shape: f32[128,256], index: 1, kind: input, shape index: {}]
  %s2 = inlined_call_operand.hbm [shape: f32[8,128], index: 2, kind: output, shape index: {0}]
  %s3 = inlined_call_operand.hbm [shape: f32[8,128], index: 3, kind: output, shape index: {1}]
  %4 = xla_tuple %s2, %s3
  %s5 = sld [smem:[#allocation0]]
  $region46: #{tpu_custom_call.1} parent=0
    _
  %s7 = ssub.s32 1, %s5
  %s8 = scalar_select 0, %s7, %s5
  $region1: #{tpu_custom_call.1} parent=0
    #allocation5 [shape = 'u8[8192]{0}', space=vmem, size = 0x2000, scoped, tag = 'input window, operand 0, single buffered']
    #allocation6 [shape = 's32[1]{0}', space=sflag, size = 0x4, scoped, tag = 'scoped memory for tpu_custom_call.1']
    #allocation7 [shape = 's32[1]{0}', space=sflag, size = 0x4, scoped, tag = 'scoped memory for tpu_custom_call.1']
    #allocation8 [shape = 'u8[131072]{0}', space=vmem, size = 0x20000, scoped, tag = 'input window, operand 1, single buffered']
    #allocation9 [shape = 's32[1]{0}', space=sflag, size = 0x4, scoped, tag = 'scoped memory for tpu_custom_call.1']
    #allocation10 [shape = 'u8[4096]{0}', space=vmem, size = 0x1000, scoped, tag = 'output window, operand 0, single buffered']
    #allocation11 [shape = 'u8[4096]{0}', space=vmem, size = 0x1000, scoped, tag = 'output window, operand 1, single buffered']
    #allocation12 [shape = 's32[1]{0}', space=sflag, size = 0x4, scoped, tag = 'scoped memory for tpu_custom_call.1']
    %9 = vsyncpa [#allocation6], 0
    %10 = vsyncpa [#allocation9], 0
    %11 = vsyncpa [#allocation7], 0
    %12 = vsyncpa [#allocation12], 0
    // Predicated region
    $region2: #{tpu_custom_call.1} parent=1 // pred_check
      _
    $region3: #{tpu_custom_call.1} parent=1 // pred_check_branch
      %14 = sbr.rel (0) target = $region5
    $region4: #{tpu_custom_call.1} parent=1 // pred_region
      %s16 = ssub.s32 256, 256
      %17 = vsyncadd [#allocation6], %s16
      %s19 = sshll.u32 [#allocation5], 4
      %s20 = int_to_ptr.vmem [resolvable:$true] %s19
      %22 = dma.hbm_to_vmem [thread:$0]  %s0, 256, %s20, [#allocation6]
    $region5: #{tpu_custom_call.1} parent=1 // pred_fallthru
      _
    // Predicated region
    $region6: #{tpu_custom_call.1} parent=1 // pred_check
      _
    $region7: #{tpu_custom_call.1} parent=1 // pred_check_branch
      %24 = sbr.rel (0) target = $region9
    $region8: #{tpu_custom_call.1} parent=1 // pred_region
      %s26 = ssub.s32 4096, 4096
      %27 = vsyncadd [#allocation9], %s26
      %s28 = sshll.u32 [#allocation8], 4
      %s29 = int_to_ptr.vmem [resolvable:$true] %s28
      %34 = dma.hbm_to_vmem [thread:$0]  %s1, 4096, %s29, [#allocation9], 256, 256, 16
    $region9: #{tpu_custom_call.1} parent=1 // pred_fallthru
      _
    // Predicated region
    $region10: #{tpu_custom_call.1} parent=1 // pred_check
      _
    $region11: #{tpu_custom_call.1} parent=1 // pred_check_branch
      %36 = sbr.rel (0) target = $region13
    $region12: #{tpu_custom_call.1} parent=1 // pred_region
      %37 = dma.done [#allocation6], 256
    $region13: #{tpu_custom_call.1} parent=1 // pred_fallthru
      _
    // Predicated region
    $region14: #{tpu_custom_call.1} parent=1 // pred_check
      _
    $region15: #{tpu_custom_call.1} parent=1 // pred_check_branch
      %39 = sbr.rel (0) target = $region17
    $region16: #{tpu_custom_call.1} parent=1 // pred_region
      %40 = dma.done [#allocation9], 4096
    $region17: #{tpu_custom_call.1} parent=1 // pred_fallthru
      _
    %p41 = scmp.eq.s32.totalorder 0, 0
    // Predicated region
    $region18: #{tpu_custom_call.1} parent=1 // pred_check
      %p42 = pneg %p41
    $region19: #{tpu_custom_call.1} parent=1 // pred_check_branch
      %44 = sbr.rel (%p42) target = $region21
    $region20: #{tpu_custom_call.1} parent=1 // pred_region
      %45 = vst [vmem:[#allocation2] sm:$0xff] 0.0
      %vm46 = vcmask 7168
      %47 = vst.msk [vmem:[#allocation4] sm:$0xff] %vm46, 0.0
      %48 = vst.msk [vmem:[#allocation4 + $0x8] sm:$0xff] %vm46, 0.0
      %49 = vst.msk [vmem:[#allocation4 + $0x10] sm:$0xff] %vm46, 0.0
      %50 = vst.msk [vmem:[#allocation4 + $0x18] sm:$0xff] %vm46, 0.0
      %51 = vst.msk [vmem:[#allocation4 + $0x20] sm:$0xff] %vm46, 0.0
      %52 = vst.msk [vmem:[#allocation4 + $0x28] sm:$0xff] %vm46, 0.0
      %53 = vst.msk [vmem:[#allocation4 + $0x30] sm:$0xff] %vm46, 0.0
      %54 = vst.msk [vmem:[#allocation4 + $0x38] sm:$0xff] %vm46, 0.0
      %55 = vst.msk [vmem:[#allocation4 + $0x40] sm:$0xff] %vm46, 0.0
      %56 = vst.msk [vmem:[#allocation4 + $0x48] sm:$0xff] %vm46, 0.0
      %57 = vst.msk [vmem:[#allocation4 + $0x50] sm:$0xff] %vm46, 0.0
      %58 = vst.msk [vmem:[#allocation4 + $0x58] sm:$0xff] %vm46, 0.0
      %59 = vst.msk [vmem:[#allocation4 + $0x60] sm:$0xff] %vm46, 0.0
      %60 = vst.msk [vmem:[#allocation4 + $0x68] sm:$0xff] %vm46, 0.0
      %61 = vst.msk [vmem:[#allocation4 + $0x70] sm:$0xff] %vm46, 0.0
      %62 = vst.msk [vmem:[#allocation4 + $0x78] sm:$0xff] %vm46, 0.0
    $region21: #{tpu_custom_call.1} parent=1 // pred_fallthru
      _
    %v63 = vld [vmem:[#allocation5] sm:$0xff]
    %v64 = vld [vmem:[#allocation5 + $0x8] sm:$0xff]
    %v65 = vld [vmem:[#allocation8] sm:$0xff]
    %v66 = vld [vmem:[#allocation8 + $0x8] sm:$0xff]
    %v67 = vld [vmem:[#allocation8 + $0x10] sm:$0xff]
    %v68 = vld [vmem:[#allocation8 + $0x18] sm:$0xff]
    %v69 = vld [vmem:[#allocation8 + $0x20] sm:$0xff]
    %v70 = vld [vmem:[#allocation8 + $0x28] sm:$0xff]
    %v71 = vld [vmem:[#allocation8 + $0x30] sm:$0xff]
    %v72 = vld [vmem:[#allocation8 + $0x38] sm:$0xff]
    %v73 = vld [vmem:[#allocation8 + $0x40] sm:$0xff]
    %v74 = vld [vmem:[#allocation8 + $0x48] sm:$0xff]
    %v75 = vld [vmem:[#allocation8 + $0x50] sm:$0xff]
    %v76 = vld [vmem:[#allocation8 + $0x58] sm:$0xff]
    %v77 = vld [vmem:[#allocation8 + $0x60] sm:$0xff]
    %v78 = vld [vmem:[#allocation8 + $0x68] sm:$0xff]
    %v79 = vld [vmem:[#allocation8 + $0x70] sm:$0xff]
    %v80 = vld [vmem:[#allocation8 + $0x78] sm:$0xff]
    %v81 = vld [vmem:[#allocation8 + $0x80] sm:$0xff]
    %v82 = vld [vmem:[#allocation8 + $0x88] sm:$0xff]
    %v83 = vld [vmem:[#allocation8 + $0x90] sm:$0xff]
    %v84 = vld [vmem:[#allocation8 + $0x98] sm:$0xff]
    %v85 = vld [vmem:[#allocation8 + $0xa0] sm:$0xff]
    %v86 = vld [vmem:[#allocation8 + $0xa8] sm:$0xff]
    %v87 = vld [vmem:[#allocation8 + $0xb0] sm:$0xff]
    %v88 = vld [vmem:[#allocation8 + $0xb8] sm:$0xff]
    %v89 = vld [vmem:[#allocation8 + $0xc0] sm:$0xff]
    %v90 = vld [vmem:[#allocation8 + $0xc8] sm:$0xff]
    %v91 = vld [vmem:[#allocation8 + $0xd0] sm:$0xff]
    %v92 = vld [vmem:[#allocation8 + $0xd8] sm:$0xff]
    %v93 = vld [vmem:[#allocation8 + $0xe0] sm:$0xff]
    %v94 = vld [vmem:[#allocation8 + $0xe8] sm:$0xff]
    %v95 = vld [vmem:[#allocation8 + $0xf0] sm:$0xff]
    %v96 = vld [vmem:[#allocation8 + $0xf8] sm:$0xff]
    %v97 = vld [vmem:[#allocation2] sm:$0xff]
    %98 = vmatprep.subr.mxu0 %v96
    %99 = vmatpush1.xpose.msra.mxu0 %v95
    %100 = vmatprep.subr.mxu0 %v94
    %101 = vmatpush1.xpose.msra.mxu0 %v93
    %102 = vmatprep.subr.mxu0 %v92
    %103 = vmatpush1.xpose.msra.mxu0 %v91
    %104 = vmatprep.subr.mxu0 %v90
    %105 = vmatpush1.xpose.msra.mxu0 %v89
    %106 = vmatprep.subr.mxu0 %v88
    %107 = vmatpush1.xpose.msra.mxu0 %v87
    %108 = vmatprep.subr.mxu0 %v86
    %109 = vmatpush1.xpose.msra.mxu0 %v85
    %110 = vmatprep.subr.mxu0 %v84
    %111 = vmatpush1.xpose.msra.mxu0 %v83
    %112 = vmatprep.subr.mxu0 %v82
    %113 = vmatpush1.xpose.msra.mxu0 %v81
    %114 = vmatprep.subr.mxu0 %v80
    %115 = vmatpush1.xpose.msra.mxu0 %v79
    %116 = vmatprep.subr.mxu0 %v78
    %117 = vmatpush1.xpose.msra.mxu0 %v77
    %118 = vmatprep.subr.mxu0 %v76
    %119 = vmatpush1.xpose.msra.mxu0 %v75
    %120 = vmatprep.subr.mxu0 %v74
    %121 = vmatpush1.xpose.msra.mxu0 %v73
    %122 = vmatprep.subr.mxu0 %v72
    %123 = vmatpush1.xpose.msra.mxu0 %v71
    %124 = vmatprep.subr.mxu0 %v70
    %125 = vmatpush1.xpose.msra.mxu0 %v69
    %126 = vmatprep.subr.mxu0 %v68
    %127 = vmatpush1.xpose.msra.mxu0 %v67
    %128 = vmatprep.subr.mxu0 %v66
    %129 = vmatpush1.xpose.msra.mxu0 %v65
    %130 = vmatprep.subr.mxu0 0.0
    %131 = vmatpush2.xpose.msra.mxu0 0.0
    %132 = vmatprep.subr.mxu0 0.0
    %133 = vmatpush2.xpose.msra.mxu0 0.0
    %134 = vmatprep.subr.mxu0 0.0
    %135 = vmatpush2.xpose.msra.mxu0 0.0
    %136 = vmatprep.subr.mxu0 0.0
    %137 = vmatpush2.xpose.msra.mxu0 0.0
    %138 = vmatprep.subr.mxu0 0.0
    %139 = vmatpush2.xpose.msra.mxu0 0.0
    %140 = vmatprep.subr.mxu0 0.0
    %141 = vmatpush2.xpose.msra.mxu0 0.0
    %142 = vmatprep.subr.mxu0 0.0
    %143 = vmatpush2.xpose.msra.mxu0 0.0
    %144 = vmatprep.subr.mxu0 0.0
    %145 = vmatpush2.xpose.msra.mxu0 0.0
    %146 = vmatprep.subr.mxu0 0.0
    %147 = vmatpush2.xpose.msra.mxu0 0.0
    %148 = vmatprep.subr.mxu0 0.0
    %149 = vmatpush2.xpose.msra.mxu0 0.0
    %150 = vmatprep.subr.mxu0 0.0
    %151 = vmatpush2.xpose.msra.mxu0 0.0
    %152 = vmatprep.subr.mxu0 0.0
    %153 = vmatpush2.xpose.msra.mxu0 0.0
    %154 = vmatprep.subr.mxu0 0.0
    %155 = vmatpush2.xpose.msra.mxu0 0.0
    %156 = vmatprep.subr.mxu0 0.0
    %157 = vmatpush2.xpose.msra.mxu0 0.0
    %158 = vmatprep.subr.mxu0 0.0
    %159 = vmatpush2.xpose.msra.mxu0 0.0
    %160 = vmatprep.subr.mxu0 0.0
    %161 = vmatpush2.xpose.msra.mxu0 0.0
    %162 = vmatprep.mubr.f32.mxu0 %v64
    %163 = vmatmul.mubr.f32.gmra.mxu0 %v63
    %v164 = vpop.f32.mrf.mxu0
    %v165 = vadd.f32 0.0, %v164
    %v166 = vpop.f32.mrf.mxu0
    %167 = vdwg.mxu0
    %v168 = vadd.f32 %v97, %v165
    %169 = vst [vmem:[#allocation2] sm:$0xff] %v168
    %v170 = vld [vmem:[#allocation4] sm:$0xff]
    %v171 = vld [vmem:[#allocation4 + $0x8] sm:$0xff]
    %v172 = vld [vmem:[#allocation4 + $0x10] sm:$0xff]
    %v173 = vld [vmem:[#allocation4 + $0x18] sm:$0xff]
    %v174 = vld [vmem:[#allocation4 + $0x20] sm:$0xff]
    %v175 = vld [vmem:[#allocation4 + $0x28] sm:$0xff]
    %v176 = vld [vmem:[#allocation4 + $0x30] sm:$0xff]
    %v177 = vld [vmem:[#allocation4 + $0x38] sm:$0xff]
    %v178 = vld [vmem:[#allocation4 + $0x40] sm:$0xff]
    %v179 = vld [vmem:[#allocation4 + $0x48] sm:$0xff]
    %v180 = vld [vmem:[#allocation4 + $0x50] sm:$0xff]
    %v181 = vld [vmem:[#allocation4 + $0x58] sm:$0xff]
    %v182 = vld [vmem:[#allocation4 + $0x60] sm:$0xff]
    %v183 = vld [vmem:[#allocation4 + $0x68] sm:$0xff]
    %v184 = vld [vmem:[#allocation4 + $0x70] sm:$0xff]
    %v185 = vld [vmem:[#allocation4 + $0x78] sm:$0xff]
    %v186 = vmul.f32 %v65, %v65
    %v187 = vmul.f32 %v66, %v66
    %v188 = vmul.f32 %v67, %v67
    %v189 = vmul.f32 %v68, %v68
    %v190 = vmul.f32 %v69, %v69
    %v191 = vmul.f32 %v70, %v70
    %v192 = vmul.f32 %v71, %v71
    %v193 = vmul.f32 %v72, %v72
    %v194 = vmul.f32 %v73, %v73
    %v195 = vmul.f32 %v74, %v74
    %v196 = vmul.f32 %v75, %v75
    %v197 = vmul.f32 %v76, %v76
    %v198 = vmul.f32 %v77, %v77
    %v199 = vmul.f32 %v78, %v78
    %v200 = vmul.f32 %v79, %v79
    %v201 = vmul.f32 %v80, %v80
    %v202 = vmul.f32 %v81, %v81
    %v203 = vmul.f32 %v82, %v82
    %v204 = vmul.f32 %v83, %v83
    %v205 = vmul.f32 %v84, %v84
    %v206 = vmul.f32 %v85, %v85
    %v207 = vmul.f32 %v86, %v86
    %v208 = vmul.f32 %v87, %v87
    %v209 = vmul.f32 %v88, %v88
    %v210 = vmul.f32 %v89, %v89
    %v211 = vmul.f32 %v90, %v90
    %v212 = vmul.f32 %v91, %v91
    %v213 = vmul.f32 %v92, %v92
    %v214 = vmul.f32 %v93, %v93
    %v215 = vmul.f32 %v94, %v94
    %v216 = vmul.f32 %v95, %v95
    %v217 = vmul.f32 %v96, %v96
    %v218 = vadd.f32 %v186, %v187
    %219 = vadd.xlane.f32.xlu0 %v218
    %v220 = vpop.xlane.xlu0 %219
    %v221 = vadd.f32 %v188, %v189
    %222 = vadd.xlane.f32.xlu0 %v221
    %v223 = vpop.xlane.xlu0 %222
    %v224 = vadd.f32 %v190, %v191
    %225 = vadd.xlane.f32.xlu0 %v224
    %v226 = vpop.xlane.xlu0 %225
    %v227 = vadd.f32 %v192, %v193
    %228 = vadd.xlane.f32.xlu0 %v227
    %v229 = vpop.xlane.xlu0 %228
    %v230 = vadd.f32 %v194, %v195
    %231 = vadd.xlane.f32.xlu0 %v230
    %v232 = vpop.xlane.xlu0 %231
    %v233 = vadd.f32 %v196, %v197
    %234 = vadd.xlane.f32.xlu0 %v233
    %v235 = vpop.xlane.xlu0 %234
    %v236 = vadd.f32 %v198, %v199
    %237 = vadd.xlane.f32.xlu0 %v236
    %v238 = vpop.xlane.xlu0 %237
    %v239 = vadd.f32 %v200, %v201
    %240 = vadd.xlane.f32.xlu0 %v239
    %v241 = vpop.xlane.xlu0 %240
    %v242 = vadd.f32 %v202, %v203
    %243 = vadd.xlane.f32.xlu0 %v242
    %v244 = vpop.xlane.xlu0 %243
    %v245 = vadd.f32 %v204, %v205
    %246 = vadd.xlane.f32.xlu0 %v245
    %v247 = vpop.xlane.xlu0 %246
    %v248 = vadd.f32 %v206, %v207
    %249 = vadd.xlane.f32.xlu0 %v248
    %v250 = vpop.xlane.xlu0 %249
    %v251 = vadd.f32 %v208, %v209
    %252 = vadd.xlane.f32.xlu0 %v251
    %v253 = vpop.xlane.xlu0 %252
    %v254 = vadd.f32 %v210, %v211
    %255 = vadd.xlane.f32.xlu0 %v254
    %v256 = vpop.xlane.xlu0 %255
    %v257 = vadd.f32 %v212, %v213
    %258 = vadd.xlane.f32.xlu0 %v257
    %v259 = vpop.xlane.xlu0 %258
    %v260 = vadd.f32 %v214, %v215
    %261 = vadd.xlane.f32.xlu0 %v260
    %v262 = vpop.xlane.xlu0 %261
    %v263 = vadd.f32 %v216, %v217
    %264 = vadd.xlane.f32.xlu0 %v263
    %v265 = vpop.xlane.xlu0 %264
    %v266 = vadd.f32 %v170, %v220
    %v267 = vadd.f32 %v171, %v223
    %v268 = vadd.f32 %v172, %v226
    %v269 = vadd.f32 %v173, %v229
    %v270 = vadd.f32 %v174, %v232
    %v271 = vadd.f32 %v175, %v235
    %v272 = vadd.f32 %v176, %v238
    %v273 = vadd.f32 %v177, %v241
    %v274 = vadd.f32 %v178, %v244
    %v275 = vadd.f32 %v179, %v247
    %v276 = vadd.f32 %v180, %v250
    %v277 = vadd.f32 %v181, %v253
    %v278 = vadd.f32 %v182, %v256
    %v279 = vadd.f32 %v183, %v259
    %v280 = vadd.f32 %v184, %v262
    %v281 = vadd.f32 %v185, %v265
    %vm282 = vcmask 7168
    %283 = vst.msk [vmem:[#allocation4] sm:$0xff] %vm282, %v266
    %284 = vst.msk [vmem:[#allocation4 + $0x8] sm:$0xff] %vm282, %v267
    %285 = vst.msk [vmem:[#allocation4 + $0x10] sm:$0xff] %vm282, %v268
    %286 = vst.msk [vmem:[#allocation4 + $0x18] sm:$0xff] %vm282, %v269
    %287 = vst.msk [vmem:[#allocation4 + $0x20] sm:$0xff] %vm282, %v270
    %288 = vst.msk [vmem:[#allocation4 + $0x28] sm:$0xff] %vm282, %v271
    %289 = vst.msk [vmem:[#allocation4 + $0x30] sm:$0xff] %vm282, %v272
    %290 = vst.msk [vmem:[#allocation4 + $0x38] sm:$0xff] %vm282, %v273
    %291 = vst.msk [vmem:[#allocation4 + $0x40] sm:$0xff] %vm282, %v274
    %292 = vst.msk [vmem:[#allocation4 + $0x48] sm:$0xff] %vm282, %v275
    %293 = vst.msk [vmem:[#allocation4 + $0x50] sm:$0xff] %vm282, %v276
    %294 = vst.msk [vmem:[#allocation4 + $0x58] sm:$0xff] %vm282, %v277
    %295 = vst.msk [vmem:[#allocation4 + $0x60] sm:$0xff] %vm282, %v278
    %296 = vst.msk [vmem:[#allocation4 + $0x68] sm:$0xff] %vm282, %v279
    %297 = vst.msk [vmem:[#allocation4 + $0x70] sm:$0xff] %vm282, %v280
    %298 = vst.msk [vmem:[#allocation4 + $0x78] sm:$0xff] %vm282, %v281
    // Predicated region
    $region22: #{tpu_custom_call.1} parent=1 // pred_check
      %p299 = pneg %p41
    $region23: #{tpu_custom_call.1} parent=1 // pred_check_branch
      %301 = sbr.rel (%p299) target = $region25
    $region24: #{tpu_custom_call.1} parent=1 // pred_region
      %302 = vst.msk [vmem:[#allocation3] sm:$0xff] %vm282, 0.0
    $region25: #{tpu_custom_call.1} parent=1 // pred_fallthru
      _
    %v303 = vld [vmem:[#allocation3] sm:$0xff]
    %v304 = vmul.f32 %v63, %v63
    %v305 = vmul.f32 %v64, %v64
    %v306 = vadd.f32 %v304, %v305
    %307 = vadd.xlane.f32.xlu0 %v306
    %v308 = vpop.xlane.xlu0 %307
    %v309 = vadd.f32 %v303, %v308
    %310 = vst.msk [vmem:[#allocation3] sm:$0xff] %vm282, %v309
    // Predicated region
    $region26: #{tpu_custom_call.1} parent=1 // pred_check
      %p311 = pneg %p41
    $region27: #{tpu_custom_call.1} parent=1 // pred_check_branch
      %313 = sbr.rel (%p311) target = $region29
    $region28: #{tpu_custom_call.1} parent=1 // pred_region
      %v314 = vld [vmem:[#allocation2] sm:$0xff]
      %v315 = vld [vmem:[#allocation3] sm:$0xff]
      %v316 = vld [vmem:[#allocation4] sm:$0xff]
      %v317 = vld [vmem:[#allocation4 + $0x8] sm:$0xff]
      %v318 = vld [vmem:[#allocation4 + $0x10] sm:$0xff]
      %v319 = vld [vmem:[#allocation4 + $0x18] sm:$0xff]
      %v320 = vld [vmem:[#allocation4 + $0x20] sm:$0xff]
      %v321 = vld [vmem:[#allocation4 + $0x28] sm:$0xff]
      %v322 = vld [vmem:[#allocation4 + $0x30] sm:$0xff]
      %v323 = vld [vmem:[#allocation4 + $0x38] sm:$0xff]
      %v324 = vld [vmem:[#allocation4 + $0x40] sm:$0xff]
      %v325 = vld [vmem:[#allocation4 + $0x48] sm:$0xff]
      %v326 = vld [vmem:[#allocation4 + $0x50] sm:$0xff]
      %v327 = vld [vmem:[#allocation4 + $0x58] sm:$0xff]
      %v328 = vld [vmem:[#allocation4 + $0x60] sm:$0xff]
      %v329 = vld [vmem:[#allocation4 + $0x68] sm:$0xff]
      %v330 = vld [vmem:[#allocation4 + $0x70] sm:$0xff]
      %v331 = vld [vmem:[#allocation4 + $0x78] sm:$0xff]
      %332 = vxpose.xlu0.b32.start [1/16] %v316, 128
      %333 = vxpose.xlu0.b32.cont [2/16] %v317, 128
      %334 = vxpose.xlu0.b32.cont [3/16] %v318, 128
      %335 = vxpose.xlu0.b32.cont [4/16] %v319, 128
      %336 = vxpose.xlu0.b32.cont [5/16] %v320, 128
      %337 = vxpose.xlu0.b32.cont [6/16] %v321, 128
      %338 = vxpose.xlu0.b32.cont [7/16] %v322, 128
      %339 = vxpose.xlu0.b32.cont [8/16] %v323, 128
      %340 = vxpose.xlu0.b32.cont [9/16] %v324, 128
      %341 = vxpose.xlu0.b32.cont [10/16] %v325, 128
      %342 = vxpose.xlu0.b32.cont [11/16] %v326, 128
      %343 = vxpose.xlu0.b32.cont [12/16] %v327, 128
      %344 = vxpose.xlu0.b32.cont [13/16] %v328, 128
      %345 = vxpose.xlu0.b32.cont [14/16] %v329, 128
      %346 = vxpose.xlu0.b32.cont [15/16] %v330, 128
      %347 = vxpose.xlu0.b32.end [16/16] %v331, 128
      %v348 = vpop.trf.xlu0
      %v349 = vpop.trf.xlu0
      %v350 = vpop.trf.xlu0
      %v351 = vpop.trf.xlu0
      %v352 = vpop.trf.xlu0
      %v353 = vpop.trf.xlu0
      %v354 = vpop.trf.xlu0
      %v355 = vpop.trf.xlu0
      %v356 = vpop.trf.xlu0
      %v357 = vpop.trf.xlu0
      %v358 = vpop.trf.xlu0
      %v359 = vpop.trf.xlu0
      %v360 = vpop.trf.xlu0
      %v361 = vpop.trf.xlu0
      %v362 = vpop.trf.xlu0
      %v363 = vpop.trf.xlu0
      %365 = vset.pattern.permute.xlu0 0
      %366 = vperm.xlu0 %365, %v315
      %v367 = vpop.permute.xlu0 %366
      %v369 = vlaneseq
      %v370 = vshrl.u32 %v369, 7
      %v371 = vsub.s32 0, %v370
      %v372 = vrot.slane %v348, %v371
      %v373 = vadd.f32 %v367, %v372
      %v374 = vmul.f32 %v314, 2.0
      %v375 = vsub.f32 %v373, %v374
      %v376 = vmax.f32 %v375, 0.0
      %v377 = vrsqrt.pop %v376
      %v378 = vmul.f32 %v376, %v377
      %vm379 = vcmp.eq.f32.partialorder %v376, inf
      %v380 = vsel %vm379, %v376, %v378
      %vm381 = vcmp.eq.f32.partialorder %v376, 0.0
      %v382 = vand.u32 %v376, 2147483648
      %v383 = vsel %vm381, %v382, %v380
      %384 = vst [vmem:[#allocation10] sm:$0xff] %v383
      %v385 = vrsqrt.pop %v315
      %v386 = vmin.f32 %v385, 1e+12
      %v387 = vrsqrt.pop %v348
      %v388 = vmin.f32 %v387, 1e+12
      %390 = vset.pattern.permute.xlu0 0
      %391 = vperm.xlu0 %390, %v386
      %v392 = vpop.permute.xlu0 %391
      %v394 = vmul.f32 %v314, %v392
      %v395 = vlaneseq
      %v396 = vshrl.u32 %v395, 7
      %v397 = vsub.s32 0, %v396
      %v398 = vrot.slane %v388, %v397
      %v399 = vmul.f32 %v394, %v398
      %400 = vst [vmem:[#allocation11] sm:$0xff] %v399
    $region29: #{tpu_custom_call.1} parent=1 // pred_fallthru
      _
    // Predicated region
    $region30: #{tpu_custom_call.1} parent=1 // pred_check
      _
    $region31: #{tpu_custom_call.1} parent=1 // pred_check_branch
      %402 = sbr.rel (0) target = $region33
    $region32: #{tpu_custom_call.1} parent=1 // pred_region
      %s404 = ssub.s32 128, 128
      %405 = vsyncadd [#allocation7], %s404
      %s407 = sshll.u32 [#allocation10], 4
      %s408 = int_to_ptr.vmem [resolvable:$true] %s407
      %410 = dma.vmem_to_hbm [thread:$0]  %s408, 128, %s2, [#allocation7]
    $region33: #{tpu_custom_call.1} parent=1 // pred_fallthru
      _
    // Predicated region
    $region34: #{tpu_custom_call.1} parent=1 // pred_check
      _
    $region35: #{tpu_custom_call.1} parent=1 // pred_check_branch
      %412 = sbr.rel (0) target = $region37
    $region36: #{tpu_custom_call.1} parent=1 // pred_region
      %s414 = ssub.s32 128, 128
      %415 = vsyncadd [#allocation12], %s414
      %s417 = sshll.u32 [#allocation11], 4
      %s418 = int_to_ptr.vmem [resolvable:$true] %s417
      %420 = dma.vmem_to_hbm [thread:$0]  %s418, 128, %s3, [#allocation12]
    $region37: #{tpu_custom_call.1} parent=1 // pred_fallthru
      _
    // Predicated region
    $region38: #{tpu_custom_call.1} parent=1 // pred_check
      _
    $region39: #{tpu_custom_call.1} parent=1 // pred_check_branch
      %422 = sbr.rel (0) target = $region41
    $region40: #{tpu_custom_call.1} parent=1 // pred_region
      %423 = dma.done [#allocation7], 128
    $region41: #{tpu_custom_call.1} parent=1 // pred_fallthru
      _
    // Predicated region
    $region42: #{tpu_custom_call.1} parent=1 // pred_check
      _
    $region43: #{tpu_custom_call.1} parent=1 // pred_check_branch
      %425 = sbr.rel (0) target = $region45
    $region44: #{tpu_custom_call.1} parent=1 // pred_region
      %426 = dma.done [#allocation12], 128
    $region45: #{tpu_custom_call.1} parent=1 // pred_fallthru
      _
    %427 = vsyncpa [#allocation6], 1
    %428 = vsyncpa [#allocation9], 1
    %429 = vsyncpa [#allocation7], 1
    %430 = vsyncpa [#allocation12], 1

</llo_original>
